<compile_context>
chip_gen: v7x
topology: tpu7x:2x2x1
jax: 0.10.0
libtpu: 0.0.40
codegen_flags: <defaults>
</compile_context>

<pallas_src>
import functools

import jax
import jax.numpy as jnp
from jax.experimental import pallas as pl
from jax.experimental.pallas import tpu as pltpu

EPS = 1e-12


def _embeddings_kernel(tok_ref, pos_ref, seg_id_ref, seg_tab_ref,
                       gamma_ref, beta_ref, out_ref, *, n_segments):
    # tok_ref:     (tb, S, H)   fused token rows (projection + bias pre-applied)
    # pos_ref:     (S, H)       resident positional table
    # seg_id_ref:  (tb, S, 1)   int32 segment ids
    # seg_tab_ref: (n_seg, H)   resident segment table
    # gamma/beta:  (1, H)
    # out_ref:     (tb, S, H)
    e = tok_ref[...] + pos_ref[...][None, :, :]              # + positional embed

    # Segment embedding: select rows of the tiny resident table in-kernel.
    seg_ids = seg_id_ref[...]                                # (tb, S, 1) int32
    seg_tab = seg_tab_ref[...]                               # (n_seg, H)
    for s in range(n_segments):                              # static unroll (2)
        sel = (seg_ids == s).astype(e.dtype)                 # (tb, S, 1)
        row = seg_tab[s:s + 1, :][None, :, :]                # (1, 1, H)
        e = e + sel * row

    # TF-style LayerNorm (epsilon inside the sqrt).
    u = jnp.mean(e, axis=-1, keepdims=True)
    d = e - u
    var = jnp.mean(d * d, axis=-1, keepdims=True)
    xn = d * jax.lax.rsqrt(var + EPS)
    y = gamma_ref[...][None, :, :] * xn + beta_ref[...][None, :, :]

    # TODO(synk): with H=32 (<128 lanes) the final store is lane-masked; packing
    # 4 sequence rows per 128-lane store needs a sublane->lane relayout
    # ((tb,S,32)->(tb,S/4,128)) which is left out to keep lowering robust.
    out_ref[...] = y.astype(out_ref.dtype)


def _pick_batch_tile(B, S, target_rows=1024):
    """Largest divisor of B whose (tb * S)-row tile stays under target_rows,
    preferring >= 2 grid steps so both v7x TensorCores get work."""
    tb = 1
    for d in range(1, B + 1):
        if B % d == 0 and d * S <= target_rows:
            tb = d
    if tb == B and B > 1:  # keep grid length >= 2 when possible (v7x megacore)
        for d in range(B - 1, 0, -1):
            if B % d == 0:
                tb = d
                break
    return tb


@functools.partial(jax.jit, static_argnames=("target_rows",))
def embeddings_forward(x, seg, params, *, target_rows=1024):
    """x, seg: (B, S) int32 token / segment ids -> (B, S, hidden) float32."""
    B, S = x.shape
    tok_table = params["tok_embed1"]          # (vocab, E)
    w2 = params["tok_embed2_w"]               # (E, H)   (transposed vs torch Linear)
    b2 = params["tok_embed2_b"]               # (H,)
    pos_table = params["pos_embed"][:S]       # (S, H)
    seg_table = params["seg_embed"]           # (n_segments, H)
    gamma = params["gamma"].reshape(1, -1)    # (1, H)
    beta = params["beta"].reshape(1, -1)      # (1, H)

    H = w2.shape[1]
    n_segments = seg_table.shape[0]

    # One-time fold of the Linear projection + bias into the token table.
    fused = jnp.dot(tok_table, w2, precision=jax.lax.Precision.HIGHEST,
                    preferred_element_type=jnp.float32) + b2      # (vocab, H)

    # The only per-row HBM stream the kernel reads: the gathered fused rows.
    tok_e = fused[x]                                    # (B, S, H)
    seg_ids = seg.astype(jnp.int32)[..., None]          # (B, S, 1) — 4 B / row

    tb = _pick_batch_tile(B, S, target_rows)
    grid = (B // tb,)

    kernel = functools.partial(_embeddings_kernel, n_segments=n_segments)

    out = pl.pallas_call(
        kernel,
        out_shape=jax.ShapeDtypeStruct((B, S, H), jnp.float32),
        grid_spec=pltpu.PrefetchScalarGridSpec(
            num_scalar_prefetch=0,
            grid=grid,
            in_specs=[
                pl.BlockSpec((tb, S, H), lambda i: (i, 0, 0)),    # fused tok rows
                pl.BlockSpec((S, H), lambda i: (0, 0)),           # pos table (resident)
                pl.BlockSpec((tb, S, 1), lambda i: (i, 0, 0)),    # segment ids
                pl.BlockSpec((n_segments, H), lambda i: (0, 0)),  # seg table (resident)
                pl.BlockSpec((1, H), lambda i: (0, 0)),           # gamma
                pl.BlockSpec((1, H), lambda i: (0, 0)),           # beta
            ],
            out_specs=pl.BlockSpec((tb, S, H), lambda i: (i, 0, 0)),
        ),
        compiler_params=pltpu.CompilerParams(
            dimension_semantics=("parallel",),
            # 32 MiB scoped VMEM is safe on every generation (v7x physical is
            # 64 MiB); re-derive tb / this limit together for huge shapes.
            vmem_limit_bytes=32 * 1024 * 1024,
        ),
    )(tok_e, pos_table, seg_ids, seg_table, gamma, beta)

    return out


def _reference(x, seg, params):
    tok_e = params["tok_embed1"][x]                               # (B, S, E)
    e = jnp.einsum("bse,eh->bsh", tok_e, params["tok_embed2_w"],
                   precision=jax.lax.Precision.HIGHEST) + params["tok_embed2_b"]
    S = x.shape[1]
    e = e + params["pos_embed"][:S][None] + params["seg_embed"][seg]
    u = e.mean(-1, keepdims=True)
    s = ((e - u) ** 2).mean(-1, keepdims=True)
    xn = (e - u) / jnp.sqrt(s + EPS)
    return params["gamma"] * xn + params["beta"]


if __name__ == "__main__":
    # cfg: vocab_size=64, embedding=16, hidden=32, max_len=16, n_segments=2
    vocab_size, embedding, hidden, max_len, n_segments = 64, 16, 32, 16, 2
    B, S = 2, 8

    key = jax.random.PRNGKey(0)
    k = jax.random.split(key, 8)
    params = {
        "tok_embed1": jax.random.normal(k[0], (vocab_size, embedding), jnp.float32) * 0.02,
        "tok_embed2_w": jax.random.normal(k[1], (embedding, hidden), jnp.float32) * 0.02,
        "tok_embed2_b": jax.random.normal(k[2], (hidden,), jnp.float32) * 0.02,
        "pos_embed": jax.random.normal(k[3], (max_len, hidden), jnp.float32) * 0.02,
        "seg_embed": jax.random.normal(k[4], (n_segments, hidden), jnp.float32) * 0.02,
        "gamma": jnp.ones((hidden,), jnp.float32),
        "beta": jnp.zeros((hidden,), jnp.float32),
    }

    x = jax.random.randint(k[5], (B, S), 0, vocab_size, dtype=jnp.int32)
    seg = jax.random.randint(k[6], (B, S), 0, n_segments, dtype=jnp.int32)

    out = embeddings_forward(x, seg, params)
    out = jax.block_until_ready(out)

    ref = _reference(x, seg, params)
    assert out.shape == (B, S, hidden)
    assert jnp.allclose(out, ref, atol=1e-5, rtol=1e-5), "mismatch vs reference"

    print("KERNEL_OK")
</pallas_src>

<mosaic_0001>
module attributes {stable_mosaic.version = 11 : i64} {
  func.func @_embeddings_kernel(%arg0: i32, %arg1: memref<1x8x32xf32, #tpu.memory_space<vmem>>, %arg2: memref<8x32xf32, #tpu.memory_space<vmem>>, %arg3: memref<1x8x1xi32, #tpu.memory_space<vmem>>, %arg4: memref<2x32xf32, #tpu.memory_space<vmem>>, %arg5: memref<1x32xf32, #tpu.memory_space<vmem>>, %arg6: memref<1x32xf32, #tpu.memory_space<vmem>>, %arg7: memref<1x8x32xf32, #tpu.memory_space<vmem>>) attributes {dimension_semantics = [#tpu.dimension_semantics<parallel>], iteration_bounds = array<i64: 2>, scalar_prefetch = 0 : i64, scratch_operands = 0 : i64, tpu.core_type = #tpu.core_type<tc>, window_params = [{transform_indices = @transform_0, window_bounds = array<i64: 1, 8, 32>}, {pipeline_mode = #tpu.pipeline_mode<synchronous>, transform_indices = @transform_1, window_bounds = array<i64: 8, 32>}, {transform_indices = @transform_2, window_bounds = array<i64: 1, 8, 1>}, {pipeline_mode = #tpu.pipeline_mode<synchronous>, transform_indices = @transform_3, window_bounds = array<i64: 2, 32>}, {pipeline_mode = #tpu.pipeline_mode<synchronous>, transform_indices = @transform_4, window_bounds = array<i64: 1, 32>}, {pipeline_mode = #tpu.pipeline_mode<synchronous>, transform_indices = @transform_5, window_bounds = array<i64: 1, 32>}, {transform_indices = @transform_6, window_bounds = array<i64: 1, 8, 32>}]} {
    %c0 = arith.constant 0 : index
    %c0_0 = arith.constant 0 : index
    %c0_1 = arith.constant 0 : index
    %0 = vector.load %arg1[%c0, %c0_0, %c0_1] : memref<1x8x32xf32, #tpu.memory_space<vmem>>, vector<1x8x32xf32>
    %c0_2 = arith.constant 0 : index
    %c0_3 = arith.constant 0 : index
    %1 = vector.load %arg2[%c0_2, %c0_3] : memref<8x32xf32, #tpu.memory_space<vmem>>, vector<8x32xf32>
    %2 = vector.shape_cast %1 : vector<8x32xf32> to vector<1x8x32xf32>
    %3 = arith.addf %0, %2 : vector<1x8x32xf32>
    %c0_4 = arith.constant 0 : index
    %c0_5 = arith.constant 0 : index
    %c0_6 = arith.constant 0 : index
    %4 = vector.load %arg3[%c0_4, %c0_5, %c0_6] : memref<1x8x1xi32, #tpu.memory_space<vmem>>, vector<1x8x1xi32>
    %c0_7 = arith.constant 0 : index
    %c0_8 = arith.constant 0 : index
    %5 = vector.load %arg4[%c0_7, %c0_8] : memref<2x32xf32, #tpu.memory_space<vmem>>, vector<2x32xf32>
    %c0_i32 = arith.constant 0 : i32
    %6 = vector.broadcast %c0_i32 : i32 to vector<1x8x1xi32>
    %7 = arith.cmpi eq, %4, %6 : vector<1x8x1xi32>
    %8 = arith.extui %7 : vector<1x8x1xi1> to vector<1x8x1xi32>
    %9 = arith.sitofp %8 : vector<1x8x1xi32> to vector<1x8x1xf32>
    %10 = vector.extract_strided_slice %5 {offsets = [0, 0], sizes = [1, 32], strides = [1, 1]} : vector<2x32xf32> to vector<1x32xf32>
    %11 = vector.shape_cast %10 : vector<1x32xf32> to vector<1x1x32xf32>
    %12 = vector.broadcast %9 : vector<1x8x1xf32> to vector<1x8x32xf32>
    %13 = vector.broadcast %11 : vector<1x1x32xf32> to vector<1x8x32xf32>
    %14 = arith.mulf %12, %13 : vector<1x8x32xf32>
    %15 = arith.addf %3, %14 : vector<1x8x32xf32>
    %c1_i32 = arith.constant 1 : i32
    %16 = vector.broadcast %c1_i32 : i32 to vector<1x8x1xi32>
    %17 = arith.cmpi eq, %4, %16 : vector<1x8x1xi32>
    %18 = arith.extui %17 : vector<1x8x1xi1> to vector<1x8x1xi32>
    %19 = arith.sitofp %18 : vector<1x8x1xi32> to vector<1x8x1xf32>
    %20 = vector.extract_strided_slice %5 {offsets = [1, 0], sizes = [1, 32], strides = [1, 1]} : vector<2x32xf32> to vector<1x32xf32>
    %21 = vector.shape_cast %20 : vector<1x32xf32> to vector<1x1x32xf32>
    %22 = vector.broadcast %19 : vector<1x8x1xf32> to vector<1x8x32xf32>
    %23 = vector.broadcast %21 : vector<1x1x32xf32> to vector<1x8x32xf32>
    %24 = arith.mulf %22, %23 : vector<1x8x32xf32>
    %25 = arith.addf %15, %24 : vector<1x8x32xf32>
    %cst = arith.constant dense<0.000000e+00> : vector<1x8xf32>
    %26 = vector.multi_reduction <add>, %25, %cst [2] : vector<1x8x32xf32> to vector<1x8xf32>
    %27 = vector.shape_cast %26 : vector<1x8xf32> to vector<1x8x1xf32>
    %cst_9 = arith.constant 3.200000e+01 : f32
    %28 = vector.broadcast %cst_9 : f32 to vector<1x8x1xf32>
    %29 = arith.divf %27, %28 : vector<1x8x1xf32>
    %30 = vector.broadcast %29 : vector<1x8x1xf32> to vector<1x8x32xf32>
    %31 = arith.subf %25, %30 : vector<1x8x32xf32>
    %32 = arith.mulf %31, %31 : vector<1x8x32xf32>
    %cst_10 = arith.constant dense<0.000000e+00> : vector<1x8xf32>
    %33 = vector.multi_reduction <add>, %32, %cst_10 [2] : vector<1x8x32xf32> to vector<1x8xf32>
    %34 = vector.shape_cast %33 : vector<1x8xf32> to vector<1x8x1xf32>
    %cst_11 = arith.constant 3.200000e+01 : f32
    %35 = vector.broadcast %cst_11 : f32 to vector<1x8x1xf32>
    %36 = arith.divf %34, %35 : vector<1x8x1xf32>
    %cst_12 = arith.constant 9.99999996E-13 : f32
    %37 = vector.broadcast %cst_12 : f32 to vector<1x8x1xf32>
    %38 = arith.addf %36, %37 : vector<1x8x1xf32>
    %39 = math.rsqrt %38 : vector<1x8x1xf32>
    %40 = vector.broadcast %39 : vector<1x8x1xf32> to vector<1x8x32xf32>
    %41 = arith.mulf %31, %40 : vector<1x8x32xf32>
    %c0_13 = arith.constant 0 : index
    %c0_14 = arith.constant 0 : index
    %42 = vector.load %arg5[%c0_13, %c0_14] : memref<1x32xf32, #tpu.memory_space<vmem>>, vector<1x32xf32>
    %43 = vector.shape_cast %42 : vector<1x32xf32> to vector<1x1x32xf32>
    %44 = vector.broadcast %43 : vector<1x1x32xf32> to vector<1x8x32xf32>
    %45 = arith.mulf %44, %41 : vector<1x8x32xf32>
    %c0_15 = arith.constant 0 : index
    %c0_16 = arith.constant 0 : index
    %46 = vector.load %arg6[%c0_15, %c0_16] : memref<1x32xf32, #tpu.memory_space<vmem>>, vector<1x32xf32>
    %47 = vector.shape_cast %46 : vector<1x32xf32> to vector<1x1x32xf32>
    %48 = vector.broadcast %47 : vector<1x1x32xf32> to vector<1x8x32xf32>
    %49 = arith.addf %45, %48 : vector<1x8x32xf32>
    %c0_17 = arith.constant 0 : index
    %c0_18 = arith.constant 0 : index
    %c0_19 = arith.constant 0 : index
    %50 = vector.load %arg7[%c0_17, %c0_18, %c0_19] : memref<1x8x32xf32, #tpu.memory_space<vmem>>, vector<1x8x32xf32>
    tpu.vector_store %arg7[%c0_17, %c0_18, %c0_19], %49 {strides = array<i32>} : memref<1x8x32xf32, #tpu.memory_space<vmem>>, vector<1x8x32xf32>,
    return
  }
  func.func @transform_0(%arg0: i32) -> (i32, i32, i32) {
    %c0_i32 = arith.constant 0 : i32
    %c0_i32_0 = arith.constant 0 : i32
    %c0_i32_1 = arith.constant 0 : i32
    return %arg0, %c0_i32, %c0_i32_0 : i32, i32, i32
  }
  func.func @transform_1(%arg0: i32) -> (i32, i32) {
    %c0_i32 = arith.constant 0 : i32
    %c0_i32_0 = arith.constant 0 : i32
    %c0_i32_1 = arith.constant 0 : i32
    return %c0_i32, %c0_i32_0 : i32, i32
  }
  func.func @transform_2(%arg0: i32) -> (i32, i32, i32) {
    %c0_i32 = arith.constant 0 : i32
    %c0_i32_0 = arith.constant 0 : i32
    %c0_i32_1 = arith.constant 0 : i32
    return %arg0, %c0_i32, %c0_i32_0 : i32, i32, i32
  }
  func.func @transform_3(%arg0: i32) -> (i32, i32) {
    %c0_i32 = arith.constant 0 : i32
    %c0_i32_0 = arith.constant 0 : i32
    %c0_i32_1 = arith.constant 0 : i32
    return %c0_i32, %c0_i32_0 : i32, i32
  }
  func.func @transform_4(%arg0: i32) -> (i32, i32) {
    %c0_i32 = arith.constant 0 : i32
    %c0_i32_0 = arith.constant 0 : i32
    %c0_i32_1 = arith.constant 0 : i32
    return %c0_i32, %c0_i32_0 : i32, i32
  }
  func.func @transform_5(%arg0: i32) -> (i32, i32) {
    %c0_i32 = arith.constant 0 : i32
    %c0_i32_0 = arith.constant 0 : i32
    %c0_i32_1 = arith.constant 0 : i32
    return %c0_i32, %c0_i32_0 : i32, i32
  }
  func.func @transform_6(%arg0: i32) -> (i32, i32, i32) {
    %c0_i32 = arith.constant 0 : i32
    %c0_i32_0 = arith.constant 0 : i32
    %c0_i32_1 = arith.constant 0 : i32
    return %arg0, %c0_i32, %c0_i32_0 : i32, i32, i32
  }
}

</mosaic_0001>

<llo_original>
// kernel: embeddings_forward.1
$region0: #{embeddings_forward.1}
  #allocation0 [shape = 'u32[]', space=smem, size = 0x4, offset = 0x4, fixed_abs, tag = 'smem constant byte address 0x4 - core index']
  #allocation1 [shape = 'u32[144,128]{1,0:T(1,128)}', space=vmem, size = 0x12000, scoped, tag = 'internal scratch']
  %s0 = inlined_call_operand.vmem [shape: f32[2,8,32], index: 0, kind: input, shape index: {}]
  %s1 = inlined_call_operand.vmem [shape: f32[8,32], index: 1, kind: input, shape index: {}]
  %s2 = inlined_call_operand.vmem [shape: s32[2,8,1], index: 2, kind: input, shape index: {}]
  %s3 = inlined_call_operand.vmem [shape: f32[2,32], index: 3, kind: input, shape index: {}]
  %s4 = inlined_call_operand.vmem [shape: f32[1,32], index: 4, kind: input, shape index: {}]
  %s5 = inlined_call_operand.vmem [shape: f32[1,32], index: 5, kind: input, shape index: {}]
  %s6 = inlined_call_operand.hbm [shape: f32[2,8,32], index: 6, kind: output, shape index: {}]
  %s7 = sld [smem:[#allocation0]]
  $region57: #{embeddings_forward.1} parent=0
    _
  %s9 = ssub.s32 1, %s7
  %s10 = scalar_select 0, %s9, %s7
  $region1: #{embeddings_forward.1} parent=0
    #allocation2 [shape = 'u8[8192]{0}', space=vmem, size = 0x2000, scoped, tag = 'output window, operand 0']
    #allocation3 [shape = 's32[2]{0}', space=sflag, size = 0x8, scoped, tag = 'scoped memory for embeddings_forward.1']
    %11 = vsyncpa [#allocation3], 0
    %s12 = scalar_lea.sflag [#allocation3], 1
    %13 = vsyncpa %s12, 0
    loop: start=0, step=1, limit=4
    $region2: #{embeddings_forward.1} parent=1 // loop_pre_header
      _
    $region3: #{embeddings_forward.1} parent=1 // loop_header
      %s15 = sphi 0, %s19
      %p16 = scmp.ge.s32.totalorder %s15, 4
      %s25 = sphi 0, %s27
      %s28 = sphi 0, %s25
      %s29 = sphi 0, %s28
      %s45 = sphi 0, %s29
      %s49 = sphi 0, %s49
      %s51 = sphi 0, %s49
      %s52 = sphi 0, %s51
      %s66 = sphi 0, %s52
      %s72 = sphi 0, %s74
      %s75 = sphi 0, %s72
      %s76 = sphi 0, %s75
      %s92 = sphi 0, %s76
      %s96 = sphi 0, %s96
      %s98 = sphi 0, %s96
      %s99 = sphi 0, %s98
      %s113 = sphi 0, %s99
      %s117 = sphi 0, %s117
      %s119 = sphi 0, %s117
      %s120 = sphi 0, %s119
      %s134 = sphi 0, %s120
      %s138 = sphi 0, %s138
      %s140 = sphi 0, %s138
      %s141 = sphi 0, %s140
      %s155 = sphi 0, %s141
      %s161 = sphi 0, %s163
      %s164 = sphi 0, %s161
      %s165 = sphi 0, %s164
      %s181 = sphi 0, %s165
    $region4: #{embeddings_forward.1} parent=1 // loop_header_branch
      %18 = sbr.rel (%p16) target = $region8
    $region5: #{embeddings_forward.1} parent=1 // loop_body
      %s20 = ssub.s32 %s15, 1
      %s21 = ssub.s32 %s15, 2
      %s22 = sadd.s32 %s15, 1
      %s23 = ssub.s32 %s15, %s22
      %p24 = scmp.eq.s32.totalorder %s23, 0
      %s26 = sadd.s32 %s25, 1
      %s27 = scalar_select %p24, %s25, %s26
      %p30 = pneg %p24
      %p31 = scmp.eq.s32.totalorder %s15, 1
      %p32 = por %p30, %p31
      %p33 = scmp.ne.s32.totalorder %s25, %s28
      %p34 = scmp.eq.s32.totalorder %s15, 0
      %p35 = por %p33, %p34
      %p36 = scmp.ne.s32.totalorder %s25, %s28
      %p37 = scmp.eq.s32.totalorder %s20, 1
      %p38 = por %p36, %p37
      %p39 = scmp.ne.s32.totalorder %s28, %s29
      %p40 = scmp.eq.s32.totalorder %s20, 0
      %p41 = por %p39, %p40
      %p42 = scmp.ne.s32.totalorder %s28, %s29
      %p43 = scmp.eq.s32.totalorder %s21, 1
      %p44 = por %p42, %p43
      %p46 = scmp.ne.s32.totalorder %s29, %s45
      %p47 = scmp.eq.s32.totalorder %s21, 0
      %p48 = por %p46, %p47
      %s50 = sadd.s32 %s49, 1
      %p53 = scmp.eq.s32.totalorder %s15, 1
      %p54 = scmp.ne.s32.totalorder %s49, %s51
      %p55 = scmp.eq.s32.totalorder %s15, 0
      %p56 = por %p54, %p55
      %p57 = scmp.ne.s32.totalorder %s49, %s51
      %p58 = scmp.eq.s32.totalorder %s20, 1
      %p59 = por %p57, %p58
      %p60 = scmp.ne.s32.totalorder %s51, %s52
      %p61 = scmp.eq.s32.totalorder %s20, 0
      %p62 = por %p60, %p61
      %p63 = scmp.ne.s32.totalorder %s51, %s52
      %p64 = scmp.eq.s32.totalorder %s21, 1
      %p65 = por %p63, %p64
      %p67 = scmp.ne.s32.totalorder %s52, %s66
      %p68 = scmp.eq.s32.totalorder %s21, 0
      %p69 = por %p67, %p68
      %s70 = ssub.s32 %s15, %s22
      %p71 = scmp.eq.s32.totalorder %s70, 0
      %s73 = sadd.s32 %s72, 1
      %s74 = scalar_select %p71, %s72, %s73
      %p77 = pneg %p71
      %p78 = scmp.eq.s32.totalorder %s15, 1
      %p79 = por %p77, %p78
      %p80 = scmp.ne.s32.totalorder %s72, %s75
      %p81 = scmp.eq.s32.totalorder %s15, 0
      %p82 = por %p80, %p81
      %p83 = scmp.ne.s32.totalorder %s72, %s75
      %p84 = scmp.eq.s32.totalorder %s20, 1
      %p85 = por %p83, %p84
      %p86 = scmp.ne.s32.totalorder %s75, %s76
      %p87 = scmp.eq.s32.totalorder %s20, 0
      %p88 = por %p86, %p87
      %p89 = scmp.ne.s32.totalorder %s75, %s76
      %p90 = scmp.eq.s32.totalorder %s21, 1
      %p91 = por %p89, %p90
      %p93 = scmp.ne.s32.totalorder %s76, %s92
      %p94 = scmp.eq.s32.totalorder %s21, 0
      %p95 = por %p93, %p94
      %s97 = sadd.s32 %s96, 1
      %p100 = scmp.eq.s32.totalorder %s15, 1
      %p101 = scmp.ne.s32.totalorder %s96, %s98
      %p102 = scmp.eq.s32.totalorder %s15, 0
      %p103 = por %p101, %p102
      %p104 = scmp.ne.s32.totalorder %s96, %s98
      %p105 = scmp.eq.s32.totalorder %s20, 1
      %p106 = por %p104, %p105
      %p107 = scmp.ne.s32.totalorder %s98, %s99
      %p108 = scmp.eq.s32.totalorder %s20, 0
      %p109 = por %p107, %p108
      %p110 = scmp.ne.s32.totalorder %s98, %s99
      %p111 = scmp.eq.s32.totalorder %s21, 1
      %p112 = por %p110, %p111
      %p114 = scmp.ne.s32.totalorder %s99, %s113
      %p115 = scmp.eq.s32.totalorder %s21, 0
      %p116 = por %p114, %p115
      %s118 = sadd.s32 %s117, 1
      %p121 = scmp.eq.s32.totalorder %s15, 1
      %p122 = scmp.ne.s32.totalorder %s117, %s119
      %p123 = scmp.eq.s32.totalorder %s15, 0
      %p124 = por %p122, %p123
      %p125 = scmp.ne.s32.totalorder %s117, %s119
      %p126 = scmp.eq.s32.totalorder %s20, 1
      %p127 = por %p125, %p126
      %p128 = scmp.ne.s32.totalorder %s119, %s120
      %p129 = scmp.eq.s32.totalorder %s20, 0
      %p130 = por %p128, %p129
      %p131 = scmp.ne.s32.totalorder %s119, %s120
      %p132 = scmp.eq.s32.totalorder %s21, 1
      %p133 = por %p131, %p132
      %p135 = scmp.ne.s32.totalorder %s120, %s134
      %p136 = scmp.eq.s32.totalorder %s21, 0
      %p137 = por %p135, %p136
      %s139 = sadd.s32 %s138, 1
      %p142 = scmp.eq.s32.totalorder %s15, 1
      %p143 = scmp.ne.s32.totalorder %s138, %s140
      %p144 = scmp.eq.s32.totalorder %s15, 0
      %p145 = por %p143, %p144
      %p146 = scmp.ne.s32.totalorder %s138, %s140
      %p147 = scmp.eq.s32.totalorder %s20, 1
      %p148 = por %p146, %p147
      %p149 = scmp.ne.s32.totalorder %s140, %s141
      %p150 = scmp.eq.s32.totalorder %s20, 0
      %p151 = por %p149, %p150
      %p152 = scmp.ne.s32.totalorder %s140, %s141
      %p153 = scmp.eq.s32.totalorder %s21, 1
      %p154 = por %p152, %p153
      %p156 = scmp.ne.s32.totalorder %s141, %s155
      %p157 = scmp.eq.s32.totalorder %s21, 0
      %p158 = por %p156, %p157
      %s159 = ssub.s32 %s15, %s22
      %p160 = scmp.eq.s32.totalorder %s159, 0
      %s162 = sadd.s32 %s161, 1
      %s163 = scalar_select %p160, %s161, %s162
      %p166 = pneg %p160
      %p167 = scmp.eq.s32.totalorder %s15, 1
      %p168 = por %p166, %p167
      %p169 = scmp.ne.s32.totalorder %s161, %s164
      %p170 = scmp.eq.s32.totalorder %s15, 0
      %p171 = por %p169, %p170
      %p172 = scmp.ne.s32.totalorder %s161, %s164
      %p173 = scmp.eq.s32.totalorder %s20, 1
      %p174 = por %p172, %p173
      %p175 = scmp.ne.s32.totalorder %s164, %s165
      %p176 = scmp.eq.s32.totalorder %s20, 0
      %p177 = por %p175, %p176
      %p178 = scmp.ne.s32.totalorder %s164, %s165
      %p179 = scmp.eq.s32.totalorder %s21, 1
      %p180 = por %p178, %p179
      %p182 = scmp.ne.s32.totalorder %s165, %s181
      %p183 = scmp.eq.s32.totalorder %s21, 0
      %p184 = por %p182, %p183
      %p185 = scmp.le.s32.totalorder 1, %s15
      %p186 = scmp.lt.s32.totalorder %s15, 3
      %p187 = pnand %p185, %p186
      %p188 = pneg %p187
      // Predicated region
      $region9: #{embeddings_forward.1} parent=5 // pred_check
        _
      $region10: #{embeddings_forward.1} parent=5 // pred_check_branch
        %190 = sbr.rel (%p187) target = $region12
      $region11: #{embeddings_forward.1} parent=5 // pred_region
        %s191 = ssub.s32 %s15, 1
        // Predicated region
        $region13: #{embeddings_forward.1} parent=11 // pred_check
          %p192 = pneg %p62
        $region14: #{embeddings_forward.1} parent=11 // pred_check_branch
          %194 = sbr.rel (%p192) target = $region16
        $region15: #{embeddings_forward.1} parent=11 // pred_region
          _
        $region16: #{embeddings_forward.1} parent=11 // pred_fallthru
          _
        // Predicated region
        $region17: #{embeddings_forward.1} parent=11 // pred_check
          %p195 = pneg %p109
        $region18: #{embeddings_forward.1} parent=11 // pred_check_branch
          %197 = sbr.rel (%p195) target = $region20
        $region19: #{embeddings_forward.1} parent=11 // pred_region
          _
        $region20: #{embeddings_forward.1} parent=11 // pred_fallthru
          _
        // Predicated region
        $region21: #{embeddings_forward.1} parent=11 // pred_check
          %p198 = pneg %p130
        $region22: #{embeddings_forward.1} parent=11 // pred_check_branch
          %200 = sbr.rel (%p198) target = $region24
        $region23: #{embeddings_forward.1} parent=11 // pred_region
          _
        $region24: #{embeddings_forward.1} parent=11 // pred_fallthru
          _
        // Predicated region
        $region25: #{embeddings_forward.1} parent=11 // pred_check
          %p201 = pneg %p151
        $region26: #{embeddings_forward.1} parent=11 // pred_check_branch
          %203 = sbr.rel (%p201) target = $region28
        $region27: #{embeddings_forward.1} parent=11 // pred_region
          _
        $region28: #{embeddings_forward.1} parent=11 // pred_fallthru
          _
      $region12: #{embeddings_forward.1} parent=5 // pred_fallthru
        _
      %p204 = scmp.lt.s32.totalorder %s15, 2
      // Predicated region
      $region29: #{embeddings_forward.1} parent=5 // pred_check
        %p205 = pneg %p204
      $region30: #{embeddings_forward.1} parent=5 // pred_check_branch
        %207 = sbr.rel (%p205) target = $region32
      $region31: #{embeddings_forward.1} parent=5 // pred_region
        // Predicated region
        $region33: #{embeddings_forward.1} parent=31 // pred_check
          %p208 = pneg %p35
        $region34: #{embeddings_forward.1} parent=31 // pred_check_branch
          %210 = sbr.rel (%p208) target = $region36
        $region35: #{embeddings_forward.1} parent=31 // pred_region
          %p211 = scmp.lt.s32.totalorder %s15, 1
          %s212 = scalar_select %p211, %s15, 1
          %s213 = smul.addr %s212, 8
          %s214 = scalar_lea.vmem %s0, %s213
        $region36: #{embeddings_forward.1} parent=31 // pred_fallthru
          _
        // Predicated region
        $region37: #{embeddings_forward.1} parent=31 // pred_check
          %p215 = pneg %p82
        $region38: #{embeddings_forward.1} parent=31 // pred_check_branch
          %217 = sbr.rel (%p215) target = $region40
        $region39: #{embeddings_forward.1} parent=31 // pred_region
          %p218 = scmp.lt.s32.totalorder %s15, 1
          %s219 = scalar_select %p218, %s15, 1
          %s220 = smul.addr %s219, 8
          %s221 = scalar_lea.vmem %s2, %s220
        $region40: #{embeddings_forward.1} parent=31 // pred_fallthru
          _
      $region32: #{embeddings_forward.1} parent=5 // pred_fallthru
        _
      %p222 = scmp.le.s32.totalorder 1, %s15
      %p223 = scmp.lt.s32.totalorder %s15, 3
      %p224 = pnand %p222, %p223
      %p225 = pneg %p224
      // Predicated region
      $region41: #{embeddings_forward.1} parent=5 // pred_check
        _
      $region42: #{embeddings_forward.1} parent=5 // pred_check_branch
        %227 = sbr.rel (%p224) target = $region44
      $region43: #{embeddings_forward.1} parent=5 // pred_region
        %s228 = ssub.s32 %s15, 1
        %p229 = scmp.lt.s32.totalorder %s20, 1
        %s230 = scalar_select %p229, %s20, 1
        %s231 = smul.addr %s230, 8
        %s232 = scalar_lea.vmem %s0, %s231
        %p233 = pneg %p41
        %p234 = pneg %p38
        %p235 = pneg %p62
        %p236 = pneg %p59
        %p237 = scmp.lt.s32.totalorder %s20, 1
        %s238 = scalar_select %p237, %s20, 1
        %s239 = smul.addr %s238, 8
        %s240 = scalar_lea.vmem %s2, %s239
        %p241 = pneg %p88
        %p242 = pneg %p85
        %p243 = pneg %p109
        %p244 = pneg %p106
        %p245 = pneg %p130
        %p246 = pneg %p127
        %p247 = pneg %p151
        %p248 = pneg %p148
        %p249 = pneg %p177
        %p250 = pneg %p174
        %s251 = sand.u32 %s164, 1
        %s252 = scalar_lea.sflag [#allocation3], %s251
        %s253 = sand.u32 %s164, 1
        %s254 = smul.addr %s253, 8
        %s255 = scalar_lea.vmem [#allocation2], %s254
        %p256 = scmp.lt.s32.totalorder %s20, 1
        %s257 = scalar_select %p256, %s20, 1
        %s258 = smul.addr %s257, 8
        %s259 = scalar_lea.vmem %s0, %s258
        %p260 = scmp.lt.s32.totalorder %s20, 1
        %s261 = scalar_select %p260, %s20, 1
        %s262 = smul.addr %s261, 8
        %s263 = scalar_lea.vmem %s2, %s262
        %v264 = vld [vmem:[%s259] sm:$0xff]
        %v265 = vld [vmem:[%s1] sm:$0xff]
        %v266 = vadd.f32 %v264, %v265
        %v267 = vld [vmem:[%s263] sm:$0xff]
        %v268 = vld [vmem:[%s3] sm:$0x3]
        %vm269 = vcmp.eq.s32.totalorder %v267, 0
        %v270 = vsel %vm269, 1, 0
        %v271 = vcvt.s32.f32 %v270
        %273 = vset.pattern.permute.xlu0 0
        %274 = vperm.xlu0 %273, %v271
        %v275 = vpop.permute.xlu0 %274
        %v277 = vlaneseq
        %v278 = vshrl.u32 %v277, 7
        %v279 = vsub.s32 0, %v278
        %v280 = vrot.slane %v268, %v279
        %v281 = vmul.f32 %v275, %v280
        %v282 = vadd.f32 %v266, %v281
        %vm283 = vcmp.eq.s32.totalorder %v267, 1
        %v284 = vsel %vm283, 1, 0
        %v285 = vcvt.s32.f32 %v284
        %287 = vset.pattern.permute.xlu0 0
        %288 = vperm.xlu0 %287, %v285
        %v289 = vpop.permute.xlu0 %288
        %v291 = vlaneseq
        %v292 = vshrl.u32 %v291, 7
        %v293 = vsub.s32 1, %v292
        %v294 = vrot.slane %v268, %v293
        %v295 = vmul.f32 %v289, %v294
        %v296 = vadd.f32 %v282, %v295
        %vm297 = vcmask 261120
        %v298 = vsel %vm297, %v296, 0.0
        %299 = vadd.xlane.f32.xlu0 %v298
        %v300 = vpop.xlane.xlu0 %299
        %v301 = vrcp.pop 32.0
        %v302 = vmul.f32 %v300, %v301
        %v303 = vsub.f32 %v296, %v302
        %v304 = vmul.f32 %v303, %v303
        %v305 = vsel %vm297, %v304, 0.0
        %306 = vadd.xlane.f32.xlu0 %v305
        %v307 = vpop.xlane.xlu0 %306
        %v308 = vmul.f32 %v307, %v301
        %v309 = vadd.f32 %v308, 1e-12
        %v310 = vrsqrt.pop %v309
        %v311 = vmul.f32 %v303, %v310
        %v312 = vld [vmem:[%s4] sm:$0x1]
        %v314 = vlaneseq
        %v315 = vshrl.u32 %v314, 7
        %v316 = vsub.s32 0, %v315
        %v317 = vrot.slane %v312, %v316
        %v319 = vmul.f32 %v317, %v311
        %v320 = vld [vmem:[%s5] sm:$0x1]
        %v322 = vlaneseq
        %v323 = vshrl.u32 %v322, 7
        %v324 = vsub.s32 0, %v323
        %v325 = vrot.slane %v320, %v324
        %v327 = vadd.f32 %v319, %v325
        %328 = vst.msk [vmem:[%s255] sm:$0xff] %vm297, %v327
        %s329 = sand.u32 %s164, 1
        %s330 = scalar_lea.sflag [#allocation3], %s329
        %s331 = sand.u32 %s164, 1
        %s332 = smul.addr %s331, 8
        %s333 = scalar_lea.vmem [#allocation2], %s332
        // Predicated region
        $region45: #{embeddings_forward.1} parent=43 // pred_check
          %p334 = pneg %p174
        $region46: #{embeddings_forward.1} parent=43 // pred_check_branch
          %336 = sbr.rel (%p334) target = $region48
        $region47: #{embeddings_forward.1} parent=43 // pred_region
          %s338 = ssub.s32 128, 128
          %339 = vsyncadd %s330, %s338
          %s340 = smul.addr %s20, 128
          %s341 = scalar_lea.hbm %s6, %s340
          %s343 = sshll.u32 %s333, 4
          %s344 = int_to_ptr.vmem [resolvable:$true] %s343
          %346 = dma.vmem_to_hbm [thread:$0]  %s344, 128, %s341, %s330
        $region48: #{embeddings_forward.1} parent=43 // pred_fallthru
          _
      $region44: #{embeddings_forward.1} parent=5 // pred_fallthru
        _
      %p347 = scmp.le.s32.totalorder 2, %s15
      // Predicated region
      $region49: #{embeddings_forward.1} parent=5 // pred_check
        %p348 = pneg %p347
      $region50: #{embeddings_forward.1} parent=5 // pred_check_branch
        %350 = sbr.rel (%p348) target = $region52
      $region51: #{embeddings_forward.1} parent=5 // pred_region
        %s351 = ssub.s32 %s15, 2
        // Predicated region
        $region53: #{embeddings_forward.1} parent=51 // pred_check
          %p352 = pneg %p180
        $region54: #{embeddings_forward.1} parent=51 // pred_check_branch
          %354 = sbr.rel (%p352) target = $region56
        $region55: #{embeddings_forward.1} parent=51 // pred_region
          %s355 = sand.u32 %s165, 1
          %s356 = scalar_lea.sflag [#allocation3], %s355
          %s357 = sand.u32 %s165, 1
          %s358 = smul.addr %s357, 8
          %s359 = scalar_lea.vmem [#allocation2], %s358
          %360 = dma.done %s356, 128
        $region56: #{embeddings_forward.1} parent=51 // pred_fallthru
          _
      $region52: #{embeddings_forward.1} parent=5 // pred_fallthru
        _
    $region6: #{embeddings_forward.1} parent=1 // loop_footer
      %s19 = sadd.s32 1, %s15
    $region7: #{embeddings_forward.1} parent=1 // loop_footer_branch
      %14 = sbr.rel target = $region3
    $region8: #{embeddings_forward.1} parent=1 // loop_exit
      _
    %361 = vsyncpa [#allocation3], 1
    %s362 = scalar_lea.sflag [#allocation3], 1
    %363 = vsyncpa %s362, 1

</llo_original>
